<compile_context>
chip_gen: v6e
topology: v6e:2x2x1
jax: 0.10.0
libtpu: 0.0.40
codegen_flags: <defaults>
</compile_context>

<pallas_src>
import functools

import jax
import jax.numpy as jnp
from jax import lax
from jax.experimental import pallas as pl
from jax.experimental.pallas import tpu as pltpu


def _round_up(x, m):
    return ((x + m - 1) // m) * m


def _pick_tile_rows(n_rows, n2, bytes_per_elem_total, target_block_bytes=4 << 20,
                    max_tile=4096):
    # +512 B/row: the thin (tile,1) int32 side-stream is lane-padded to 128 in VMEM.
    bytes_per_row = max(1, n2 * bytes_per_elem_total + 512)
    t = max(8, target_block_bytes // bytes_per_row)
    t = min(t, max_tile, _round_up(n_rows, 8))
    return int(max(8, (t // 8) * 8))


def _ce_loss_kernel(row_tgt_ref, pred_ref, gt_ref, out_ref, *,
                    tile_rows, n2, n_rows, onehot_gt):
    i = pl.program_id(0)

    pred = pred_ref[...].astype(jnp.float32)          # (tile_rows, n2), upcast in-kernel
    row_tgt = row_tgt_ref[...]                        # (tile_rows, 1) int32

    cols = lax.broadcasted_iota(jnp.int32, (tile_rows, n2), 1)
    col_valid = cols < row_tgt                        # broadcast (tile_rows,1)->(tile_rows,n2)

    # Row validity: beyond src_ns[b] the thin stream carries 0; also mask the
    # padded tail rows of the boundary tile via a global-row iota.
    grow = lax.broadcasted_iota(jnp.int32, (tile_rows, 1), 0) + i * tile_rows
    row_valid = jnp.logical_and(row_tgt > 0, grow < n_rows)

    gt = gt_ref[...].astype(jnp.float32)              # (tile_rows, n2)
    if onehot_gt:
        # gt is a 0/1 permutation matrix -> gather via a single masked lane-reduce.
        picked = jnp.sum(jnp.where(col_valid, pred * gt, 0.0), axis=-1, keepdims=True)
    else:
        # Faithful torch.max(...).indices (first max among valid columns).
        masked_gt = jnp.where(col_valid, gt, -jnp.inf)
        row_max = jnp.max(masked_gt, axis=-1, keepdims=True)
        is_max = jnp.logical_and(masked_gt == row_max, col_valid)
        first_idx = jnp.min(jnp.where(is_max, cols, jnp.int32(n2)),
                            axis=-1, keepdims=True)
        picked = jnp.sum(jnp.where(cols == first_idx, pred, 0.0),
                         axis=-1, keepdims=True)

    # Mask invalid / padded rows *before* the log so no garbage reaches the sum.
    picked = jnp.where(row_valid, picked, 1.0)        # log(1)=0 for masked rows
    partial = -jnp.sum(jnp.log(picked))               # scalar per tile

    # Lane-dense, per-tile-disjoint output block: partial at [0,0], zeros elsewhere.
    r8 = lax.broadcasted_iota(jnp.int32, (8, 128), 0)
    c128 = lax.broadcasted_iota(jnp.int32, (8, 128), 1)
    out_ref[...] = jnp.where(jnp.logical_and(r8 == 0, c128 == 0), partial, 0.0)


def cross_entropy_loss(pred_dsmat, gt_perm, src_ns, tgt_ns, *,
                       tile_rows=None, onehot_gt=True):
    """Averaged permutation cross-entropy loss (scalar f32).

    pred_dsmat, gt_perm: (B, n1, n2), any float/int dtype (streamed natively,
    upcast to f32 inside the kernel). src_ns, tgt_ns: (B,) ints.
    onehot_gt=True assumes gt_perm rows are one-hot within the valid block
    (true permutation matrices); set False for soft gt (exact argmax semantics).
    """
    assert pred_dsmat.shape == gt_perm.shape and pred_dsmat.ndim == 3
    B, n1, n2 = pred_dsmat.shape

    src_ns = src_ns.astype(jnp.int32)
    tgt_ns = tgt_ns.astype(jnp.int32)

    n_rows = B * n1
    pred2 = pred_dsmat.reshape(n_rows, n2)     # native dtype, metadata-only reshape
    gt2 = gt_perm.reshape(n_rows, n2)

    # Thin per-row side stream: number of valid target columns (0 => invalid row).
    row_ids = jnp.arange(n1, dtype=jnp.int32)
    row_tgt = jnp.where(row_ids[None, :] < src_ns[:, None], tgt_ns[:, None], 0)
    row_tgt = row_tgt.reshape(n_rows, 1).astype(jnp.int32)

    pisz = jnp.dtype(pred2.dtype).itemsize
    gisz = jnp.dtype(gt2.dtype).itemsize

    if tile_rows is None:
        tn = _pick_tile_rows(n_rows, n2, pisz + gisz)
    else:
        tn = int(tile_rows)
        assert tn % 8 == 0, "tile_rows must be a multiple of 8"
    n_tiles = pl.cdiv(n_rows, tn)

    # VMEM budget: 2 pipeline buffers x (pred + gt + thin stream) blocks + output,
    # with headroom; capped at 48 MiB (safe on v7x's 64 MiB/TC, v6e/v5e 128 MiB).
    block_bytes = tn * (n2 * (pisz + gisz) + 512) + 8 * 128 * 4
    vmem_limit_bytes = int(min(max(4 * block_bytes + (2 << 20), 24 << 20), 48 << 20))

    kernel = functools.partial(_ce_loss_kernel, tile_rows=tn, n2=n2,
                               n_rows=n_rows, onehot_gt=onehot_gt)

    partials = pl.pallas_call(
        kernel,
        out_shape=jax.ShapeDtypeStruct((n_tiles * 8, 128), jnp.float32),
        grid=(n_tiles,),
        in_specs=[
            pl.BlockSpec((tn, 1), lambda i: (i, 0)),     # row_tgt (thin)
            pl.BlockSpec((tn, n2), lambda i: (i, 0)),    # pred rows
            pl.BlockSpec((tn, n2), lambda i: (i, 0)),    # gt rows
        ],
        out_specs=pl.BlockSpec((8, 128), lambda i: (i, 0)),
        compiler_params=pltpu.CompilerParams(
            dimension_semantics=("parallel",),           # disjoint outputs per tile
            vmem_limit_bytes=vmem_limit_bytes,
        ),
    )(row_tgt, pred2, gt2)

    n_sum = jnp.sum(src_ns).astype(jnp.float32)          # reference also divides blindly
    return jnp.sum(partials) / n_sum


def cross_entropy_loss_ref(pred_dsmat, gt_perm, src_ns, tgt_ns):
    """Pure-JAX mirror of the PyTorch reference (reduction='sum' / n_sum)."""
    B = pred_dsmat.shape[0]
    loss = jnp.float32(0.0)
    n_sum = 0.0
    for b in range(B):
        s = int(src_ns[b])
        t = int(tgt_ns[b])
        p = pred_dsmat[b, :s, :t].astype(jnp.float32)
        g = gt_perm[b, :s, :t]
        idx = jnp.argmax(g, axis=-1)
        nll = -jnp.log(p[jnp.arange(s), idx])
        loss = loss + jnp.sum(nll)
        n_sum += s
    return loss / jnp.float32(n_sum)


if __name__ == "__main__":
    key = jax.random.PRNGKey(0)
    k1, k2 = jax.random.split(key)

    B, n1, n2 = 2, 16, 16
    # Predicted doubly-stochastic-ish matrix: row-softmax of random logits (f32, in (0,1)).
    logits = jax.random.normal(k1, (B, n1, n2), dtype=jnp.float32)
    pred = jax.nn.softmax(logits, axis=-1)

    src_ns = jnp.array([12, 16], dtype=jnp.int32)
    tgt_ns = jnp.array([14, 16], dtype=jnp.int32)

    # Ground-truth permutation matrices whose valid rows map into valid columns;
    # stored as bf16 (0/1 exact) to exercise the native narrow-dtype streaming path.
    perm_keys = jax.random.split(k2, B)
    gts = []
    for b in range(B):
        s, t = int(src_ns[b]), int(tgt_ns[b])
        perm_valid = jax.random.permutation(perm_keys[b], t)[:s]
        idx_full = jnp.concatenate(
            [perm_valid, jnp.zeros((n1 - s,), dtype=perm_valid.dtype)])
        gts.append(jax.nn.one_hot(idx_full, n2, dtype=jnp.float32))
    gt = jnp.stack(gts).astype(jnp.bfloat16)

    ref = cross_entropy_loss_ref(pred, gt, src_ns, tgt_ns)

    # (auto tile, one-hot shortcut), (small tile -> multi-tile), (non-dividing tile
    #  -> padded boundary block, exact argmax path).
    for tr, onehot in [(None, True), (8, True), (24, False)]:
        loss = cross_entropy_loss(pred, gt, src_ns, tgt_ns,
                                  tile_rows=tr, onehot_gt=onehot)
        loss = jax.block_until_ready(loss)
        assert jnp.allclose(loss, ref, rtol=1e-5, atol=1e-5), (tr, onehot, loss, ref)

    print("KERNEL_OK")
</pallas_src>

<mosaic_0001>
module attributes {stable_mosaic.version = 11 : i64} {
  func.func @_ce_loss_kernel(%arg0: i32, %arg1: memref<32x1xi32, #tpu.memory_space<vmem>>, %arg2: memref<32x16xf32, #tpu.memory_space<vmem>>, %arg3: memref<32x16xbf16, #tpu.memory_space<vmem>>, %arg4: memref<8x128xf32, #tpu.memory_space<vmem>>) attributes {dimension_semantics = [#tpu.dimension_semantics<parallel>], iteration_bounds = array<i64: 1>, scalar_prefetch = 0 : i64, scratch_operands = 0 : i64, tpu.core_type = #tpu.core_type<tc>, window_params = [{transform_indices = @transform_0, window_bounds = array<i64: 32, 1>}, {transform_indices = @transform_1, window_bounds = array<i64: 32, 16>}, {transform_indices = @transform_2, window_bounds = array<i64: 32, 16>}, {transform_indices = @transform_3, window_bounds = array<i64: 8, 128>}]} {
    %c0 = arith.constant 0 : index
    %c0_0 = arith.constant 0 : index
    %0 = vector.load %arg2[%c0, %c0_0] : memref<32x16xf32, #tpu.memory_space<vmem>>, vector<32x16xf32>
    %c0_1 = arith.constant 0 : index
    %c0_2 = arith.constant 0 : index
    %1 = vector.load %arg1[%c0_1, %c0_2] : memref<32x1xi32, #tpu.memory_space<vmem>>, vector<32x1xi32>
    %2 = tpu.iota {dimensions = array<i32: 1>} : vector<32x16xi32>
    %3 = vector.broadcast %1 : vector<32x1xi32> to vector<32x16xi32>
    %4 = arith.cmpi slt, %2, %3 : vector<32x16xi32>
    %5 = tpu.iota {dimensions = array<i32: 0>} : vector<32x1xi32>
    %c32_i32 = arith.constant 32 : i32
    %6 = arith.muli %arg0, %c32_i32 : i32
    %7 = vector.broadcast %6 : i32 to vector<32x1xi32>
    %8 = arith.addi %5, %7 : vector<32x1xi32>
    %c0_i32 = arith.constant 0 : i32
    %9 = vector.broadcast %c0_i32 : i32 to vector<32x1xi32>
    %10 = arith.cmpi sgt, %1, %9 : vector<32x1xi32>
    %c32_i32_3 = arith.constant 32 : i32
    %11 = vector.broadcast %c32_i32_3 : i32 to vector<32x1xi32>
    %12 = arith.cmpi slt, %8, %11 : vector<32x1xi32>
    %13 = arith.andi %10, %12 : vector<32x1xi1>
    %c0_4 = arith.constant 0 : index
    %c0_5 = arith.constant 0 : index
    %14 = vector.load %arg3[%c0_4, %c0_5] : memref<32x16xbf16, #tpu.memory_space<vmem>>, vector<32x16xbf16>
    %15 = arith.extf %14 : vector<32x16xbf16> to vector<32x16xf32>
    %16 = arith.mulf %0, %15 : vector<32x16xf32>
    %cst = arith.constant 0.000000e+00 : f32
    %17 = vector.broadcast %cst : f32 to vector<32x16xf32>
    %18 = arith.select %4, %16, %17 : vector<32x16xi1>, vector<32x16xf32>
    %cst_6 = arith.constant dense<0.000000e+00> : vector<32xf32>
    %19 = vector.multi_reduction <add>, %18, %cst_6 [1] : vector<32x16xf32> to vector<32xf32>
    %20 = vector.shape_cast %19 : vector<32xf32> to vector<32x1xf32>
    %cst_7 = arith.constant 1.000000e+00 : f32
    %21 = vector.broadcast %cst_7 : f32 to vector<32x1xf32>
    %22 = arith.select %13, %20, %21 : vector<32x1xi1>, vector<32x1xf32>
    %23 = math.log %22 : vector<32x1xf32>
    %24 = vector.shape_cast %23 : vector<32x1xf32> to vector<1x32x1xf32>
    %cst_8 = arith.constant dense<0.000000e+00> : vector<1xf32>
    %25 = vector.multi_reduction <add>, %24, %cst_8 [1, 2] : vector<1x32x1xf32> to vector<1xf32>
    %26 = vector.shape_cast %25 : vector<1xf32> to vector<1x1x1xf32>
    %27 = vector.extract %26[0, 0, 0] : f32 from vector<1x1x1xf32>
    %cst_9 = arith.constant 0.000000e+00 : f32
    %28 = arith.subf %cst_9, %27 : f32
    %29 = tpu.iota {dimensions = array<i32: 0>} : vector<8x128xi32>
    %30 = tpu.iota {dimensions = array<i32: 1>} : vector<8x128xi32>
    %c0_i32_10 = arith.constant 0 : i32
    %31 = vector.broadcast %c0_i32_10 : i32 to vector<8x128xi32>
    %32 = arith.cmpi eq, %29, %31 : vector<8x128xi32>
    %c0_i32_11 = arith.constant 0 : i32
    %33 = vector.broadcast %c0_i32_11 : i32 to vector<8x128xi32>
    %34 = arith.cmpi eq, %30, %33 : vector<8x128xi32>
    %35 = arith.andi %32, %34 : vector<8x128xi1>
    %cst_12 = arith.constant 0.000000e+00 : f32
    %36 = vector.broadcast %28 : f32 to vector<8x128xf32>
    %37 = vector.broadcast %cst_12 : f32 to vector<8x128xf32>
    %38 = arith.select %35, %36, %37 : vector<8x128xi1>, vector<8x128xf32>
    %c0_13 = arith.constant 0 : index
    %c0_14 = arith.constant 0 : index
    %39 = vector.load %arg4[%c0_13, %c0_14] : memref<8x128xf32, #tpu.memory_space<vmem>>, vector<8x128xf32>
    tpu.vector_store %arg4[%c0_13, %c0_14], %38 {strides = array<i32>} : memref<8x128xf32, #tpu.memory_space<vmem>>, vector<8x128xf32>,
    return
  }
  func.func @transform_0(%arg0: i32) -> (i32, i32) {
    %c0_i32 = arith.constant 0 : i32
    %c0_i32_0 = arith.constant 0 : i32
    return %arg0, %c0_i32 : i32, i32
  }
  func.func @transform_1(%arg0: i32) -> (i32, i32) {
    %c0_i32 = arith.constant 0 : i32
    %c0_i32_0 = arith.constant 0 : i32
    return %arg0, %c0_i32 : i32, i32
  }
  func.func @transform_2(%arg0: i32) -> (i32, i32) {
    %c0_i32 = arith.constant 0 : i32
    %c0_i32_0 = arith.constant 0 : i32
    return %arg0, %c0_i32 : i32, i32
  }
  func.func @transform_3(%arg0: i32) -> (i32, i32) {
    %c0_i32 = arith.constant 0 : i32
    %c0_i32_0 = arith.constant 0 : i32
    return %arg0, %c0_i32 : i32, i32
  }
}

</mosaic_0001>

<llo_original>
// kernel: tpu_custom_call.1
$region0: #{tpu_custom_call.1}
  #allocation0 [shape = 'u32[]', space=smem, size = 0x4, offset = 0x4, fixed_abs, tag = 'smem constant byte address 0x4 - core index']
  #allocation1 [shape = 'u32[144,128]{1,0:T(1,128)}', space=vmem, size = 0x12000, scoped, tag = 'internal scratch']
  %s0 = inlined_call_operand.vmem [shape: s32[32,1], index: 0, kind: input, shape index: {}]
  %s1 = inlined_call_operand.vmem [shape: f32[32,16], index: 1, kind: input, shape index: {}]
  %s2 = inlined_call_operand.vmem [shape: bf16[32,16], index: 2, kind: input, shape index: {}]
  %s3 = inlined_call_operand.hbm [shape: f32[8,128], index: 3, kind: output, shape index: {}]
  %s4 = sld [smem:[#allocation0]]
  $region22: #{tpu_custom_call.1} parent=0
    _
  %s6 = ssub.s32 1, %s4
  %s7 = scalar_select 0, %s6, %s4
  $region1: #{tpu_custom_call.1} parent=0
    #allocation2 [shape = 'u8[4096]{0}', space=vmem, size = 0x1000, scoped, tag = 'output window, operand 0, single buffered']
    #allocation3 [shape = 's32[1]{0}', space=sflag, size = 0x4, scoped, tag = 'scoped memory for tpu_custom_call.1']
    %8 = vsyncpa [#allocation3], 0
    // Predicated region
    $region2: #{tpu_custom_call.1} parent=1 // pred_check
      _
    $region3: #{tpu_custom_call.1} parent=1 // pred_check_branch
      %10 = sbr.rel (0) target = $region5
    $region4: #{tpu_custom_call.1} parent=1 // pred_region
      _
    $region5: #{tpu_custom_call.1} parent=1 // pred_fallthru
      _
    // Predicated region
    $region6: #{tpu_custom_call.1} parent=1 // pred_check
      _
    $region7: #{tpu_custom_call.1} parent=1 // pred_check_branch
      %12 = sbr.rel (0) target = $region9
    $region8: #{tpu_custom_call.1} parent=1 // pred_region
      _
    $region9: #{tpu_custom_call.1} parent=1 // pred_fallthru
      _
    // Predicated region
    $region10: #{tpu_custom_call.1} parent=1 // pred_check
      _
    $region11: #{tpu_custom_call.1} parent=1 // pred_check_branch
      %14 = sbr.rel (0) target = $region13
    $region12: #{tpu_custom_call.1} parent=1 // pred_region
      _
    $region13: #{tpu_custom_call.1} parent=1 // pred_fallthru
      _
    %v15 = vld [vmem:[%s1] sm:$0xff]
    %v16 = vld [vmem:[%s1 + $0x8] sm:$0xff]
    %v17 = vld [vmem:[%s1 + $0x10] sm:$0xff]
    %v18 = vld [vmem:[%s1 + $0x18] sm:$0xff]
    %v19 = vld [vmem:[%s0] sm:$0xff]
    %v20 = vld [vmem:[%s0 + $0x8] sm:$0xff]
    %v21 = vld [vmem:[%s0 + $0x10] sm:$0xff]
    %v22 = vld [vmem:[%s0 + $0x18] sm:$0xff]
    %v23 = vlaneseq
    %v24 = vand.u32 %v23, 127
    %25 = vset.pattern.permute.xlu0 0
    %26 = vperm.xlu0 %25, %v19
    %v27 = vpop.permute.xlu0 %26
    %28 = vset.pattern.permute.xlu0 0
    %29 = vperm.xlu0 %28, %v20
    %v30 = vpop.permute.xlu0 %29
    %31 = vset.pattern.permute.xlu0 0
    %32 = vperm.xlu0 %31, %v21
    %v33 = vpop.permute.xlu0 %32
    %34 = vset.pattern.permute.xlu0 0
    %35 = vperm.xlu0 %34, %v22
    %v36 = vpop.permute.xlu0 %35
    %vm37 = vcmp.lt.s32.totalorder %v24, %v27
    %vm38 = vcmp.lt.s32.totalorder %v24, %v30
    %vm39 = vcmp.lt.s32.totalorder %v24, %v33
    %vm40 = vcmp.lt.s32.totalorder %v24, %v36
    %v41 = vlaneseq
    %v42 = vshrl.u32 %v41, 7
    %v43 = vadd.s32 %v42, 8
    %v44 = vadd.s32 %v42, 16
    %v45 = vadd.s32 %v42, 24
    %s46 = smul.u32 0, 32
    %v47 = vstv %s46
    %v48 = vadd.s32 %v42, %v47
    %v49 = vadd.s32 %v43, %v47
    %v50 = vadd.s32 %v44, %v47
    %v51 = vadd.s32 %v45, %v47
    %vm52 = vcmp.gt.s32.totalorder %v19, 0
    %vm53 = vcmp.gt.s32.totalorder %v20, 0
    %vm54 = vcmp.gt.s32.totalorder %v21, 0
    %vm55 = vcmp.gt.s32.totalorder %v22, 0
    %vm56 = vcmp.lt.s32.totalorder %v48, 32
    %vm57 = vcmp.lt.s32.totalorder %v49, 32
    %vm58 = vcmp.lt.s32.totalorder %v50, 32
    %vm59 = vcmp.lt.s32.totalorder %v51, 32
    %vm60 = vmand %vm52, %vm56
    %vm61 = vmand %vm53, %vm57
    %vm62 = vmand %vm54, %vm58
    %vm63 = vmand %vm55, %vm59
    %v64 = vld [vmem:[%s2] sm:$0xf]
    %v65 = vld [vmem:[%s2 + $0x4] sm:$0xf]
    %v66 = vld [vmem:[%s2 + $0x8] sm:$0xf]
    %v67 = vld [vmem:[%s2 + $0xc] sm:$0xf]
    %v68 = vunpack.c.l.bf16 %v64
    %v69 = vunpack.c.l.bf16 %v65
    %v70 = vunpack.c.l.bf16 %v66
    %v71 = vunpack.c.l.bf16 %v67
    %v72 = vmul.f32 %v15, %v68
    %v73 = vmul.f32 %v16, %v69
    %v74 = vmul.f32 %v17, %v70
    %v75 = vmul.f32 %v18, %v71
    %v76 = vsel %vm37, %v72, 0.0
    %v77 = vsel %vm38, %v73, 0.0
    %v78 = vsel %vm39, %v74, 0.0
    %v79 = vsel %vm40, %v75, 0.0
    %vm80 = vcmask 130048
    %v81 = vsel %vm80, %v76, 0.0
    %82 = vadd.xlane.f32.xlu0 %v81
    %v83 = vpop.xlane.xlu0 %82
    %v84 = vsel %vm80, %v77, 0.0
    %85 = vadd.xlane.f32.xlu0 %v84
    %v86 = vpop.xlane.xlu0 %85
    %v87 = vsel %vm80, %v78, 0.0
    %88 = vadd.xlane.f32.xlu0 %v87
    %v89 = vpop.xlane.xlu0 %88
    %v90 = vsel %vm80, %v79, 0.0
    %91 = vadd.xlane.f32.xlu0 %v90
    %v92 = vpop.xlane.xlu0 %91
    %v93 = vsel %vm60, %v83, 1.0
    %v94 = vsel %vm61, %v86, 1.0
    %v95 = vsel %vm62, %v89, 1.0
    %v96 = vsel %vm63, %v92, 1.0
    %v97 = vlog2.pop %v93
    %v98 = vmul.f32 %v97, 0.6931472
    %v99 = vlog2.pop %v94
    %v100 = vmul.f32 %v99, 0.6931472
    %v101 = vlog2.pop %v95
    %v102 = vmul.f32 %v101, 0.6931472
    %v103 = vlog2.pop %v96
    %v104 = vmul.f32 %v103, 0.6931472
    %vm105 = vcmask 7168
    %v106 = vsel %vm105, %v98, 0.0
    %v107 = vsel %vm105, %v100, 0.0
    %v108 = vadd.f32 %v106, %v107
    %v109 = vsel %vm105, %v102, 0.0
    %v110 = vadd.f32 %v108, %v109
    %v111 = vsel %vm105, %v104, 0.0
    %v112 = vadd.f32 %v110, %v111
    %113 = vadd.xlane.f32.xlu0 %v112
    %v114 = vpop.xlane.xlu0 %113
    %v115 = vrot.slane %v114, 4
    %v116 = vadd.f32 %v114, %v115
    %v117 = vrot.slane %v116, 2
    %v118 = vadd.f32 %v116, %v117
    %v119 = vrot.slane %v118, 1
    %v120 = vadd.f32 %v118, %v119
    %s121 = vtos %v120
    %s122 = ssub.f32 0.0, %s121
    %vm123 = vcmp.eq.s32.totalorder %v42, 0
    %vm124 = vcmp.eq.s32.totalorder %v24, 0
    %vm125 = vmand %vm123, %vm124
    %v126 = vstv %s122
    %v127 = vsel %vm125, %v126, 0.0
    %128 = vst [vmem:[#allocation2] sm:$0xff] %v127
    // Predicated region
    $region14: #{tpu_custom_call.1} parent=1 // pred_check
      _
    $region15: #{tpu_custom_call.1} parent=1 // pred_check_branch
      %130 = sbr.rel (0) target = $region17
    $region16: #{tpu_custom_call.1} parent=1 // pred_region
      %s132 = ssub.s32 128, 128
      %133 = vsyncadd [#allocation3], %s132
      %s135 = sshll.u32 [#allocation2], 4
      %s136 = int_to_ptr.vmem [resolvable:$true] %s135
      %138 = dma.vmem_to_hbm [thread:$0]  %s136, 128, %s3, [#allocation3]
    $region17: #{tpu_custom_call.1} parent=1 // pred_fallthru
      _
    // Predicated region
    $region18: #{tpu_custom_call.1} parent=1 // pred_check
      _
    $region19: #{tpu_custom_call.1} parent=1 // pred_check_branch
      %140 = sbr.rel (0) target = $region21
    $region20: #{tpu_custom_call.1} parent=1 // pred_region
      %141 = dma.done [#allocation3], 128
    $region21: #{tpu_custom_call.1} parent=1 // pred_fallthru
      _
    %142 = vsyncpa [#allocation3], 1

</llo_original>
